<compile_context>
chip_gen: v7x
topology: tpu7x:2x2x1
jax: 0.10.0
libtpu: 0.0.40
codegen_flags: <defaults>
</compile_context>

<pallas_src>
import functools

import jax
import jax.numpy as jnp
from jax.experimental import pallas as pl
from jax.experimental.pallas import tpu as pltpu


# ----------------------- exact-erf GELU (shared math) -----------------------

_ERF_ALPHA = (0.00022905065861350646, 0.0034082910107109506, 0.050955695062380861,
              0.18520832239976145, 1.128379143519084)
_ERF_BETA = (-1.1791602954361697e-07, 2.3547966471313185e-05, 0.0010179625278914885,
             0.014070470171167667, 0.11098505178285362, 0.49746925110067538, 1.0)


def _polyval(coeffs, x):
    acc = coeffs[0]
    for c in coeffs[1:]:
        acc = acc * x + c
    return acc


def _erf_f32(x, recip):
    # erf(x) ~= x * P(x^2) / Q(x^2) (same rational approximation XLA uses);
    # |x| clamped to 4 (erf(4) == 1 within f32 eps).
    x = jnp.clip(x, -4.0, 4.0)
    x2 = x * x
    return (x * _polyval(_ERF_ALPHA, x2)) * recip(_polyval(_ERF_BETA, x2))


def _gelu_erf(x, recip=None):
    # Exact-erf GELU (PyTorch nn.GELU default), float32 accuracy.
    if recip is None:
        recip = lambda v: 1.0 / v
    return 0.5 * x * (1.0 + _erf_f32(x * 0.7071067811865476, recip))


# ------------------------------ Pallas kernel ------------------------------

def _mlp_head_kernel(*refs, num_layers, true_dims, compute_dtype, matmul_precision):
    """Fused MLP classification head.

    refs = [x_ref, (w_ref, aux_ref) per layer, out_ref]
      aux_ref rows: 0 = bias, 1 = ln_gamma, 2 = ln_beta (all f32, lane-padded).
    All feature dims are pre-padded to multiples of 128; padded weight rows/cols
    and padded bias / LN lanes are zero, so padded lanes carry exact zeros
    through the whole stack.
    """
    x_ref = refs[0]
    out_ref = refs[-1]
    prefs = refs[1:-1]

    # EUP-routed reciprocal: the rational-erf GELU is otherwise VALU-bound while
    # the EUP slot sits idle at these 128-wide matmul shapes.
    recip = functools.partial(pl.reciprocal, approx=False)

    h = x_ref[...]                        # already compute_dtype (pre-cast on host)
    for li in range(num_layers):
        last = li == num_layers - 1
        w_ref = prefs[2 * li]
        aux_ref = prefs[2 * li + 1]

        lhs = h if h.dtype == compute_dtype else h.astype(compute_dtype)
        y = jnp.dot(lhs, w_ref[...],
                    preferred_element_type=jnp.float32,
                    precision=matmul_precision)
        y = y + aux_ref[0:1, :]           # bias (f32)

        if not last:
            g = aux_ref[1:2, :]
            be = aux_ref[2:3, :]
            d_true = true_dims[li + 1]
            d_pad = y.shape[-1]
            if d_true == d_pad:
                mu = jnp.mean(y, axis=-1, keepdims=True)
                var = jnp.mean(jnp.square(y - mu), axis=-1, keepdims=True)
            else:
                # LayerNorm statistics over the real features only (static mask);
                # padded lanes are re-zeroed by g = be = 0 below.
                mask = (jax.lax.broadcasted_iota(jnp.int32, y.shape, 1)
                        < d_true).astype(jnp.float32)
                inv_n = jnp.float32(1.0 / d_true)
                mu = jnp.sum(y * mask, axis=-1, keepdims=True) * inv_n
                var = jnp.sum(jnp.square(y - mu) * mask, axis=-1,
                              keepdims=True) * inv_n
            y = (y - mu) * jax.lax.rsqrt(var + jnp.float32(1e-5))
            y = y * g + be                # padded lanes: g = be = 0 -> exact 0
            y = _gelu_erf(y, recip)       # GELU(0) == 0
            # TODO(synk): Dropout (training-time only, identity in eval) omitted.
        h = y

    # Lane-major logits: only column 0 of the 128-padded last layer is real.
    # Transpose (tm, 128) -> (128, tm) on the XLU (free slot) and store one
    # lane-dense (1, tm) row -> output HBM writeback is 4 B/row, not 512 B/row.
    out_ref[...] = jnp.transpose(h)[0:1, :].astype(out_ref.dtype)


# ------------------------------ host wrappers ------------------------------

def _round_up(n, m):
    return ((n + m - 1) // m) * m


def _choose_tiling(batch):
    """Row (batch) tiling for the 'parallel' M grid axis."""
    if batch <= 128:
        tm = _round_up(max(batch, 1), 8)        # single grid step; tm == m_pad
        return tm, tm
    # >= 2 grid steps (v7x: shard across both TensorCores); tm a multiple of 128
    # so the lane-major (1, tm) output blocks stay lane-dense; capped at 512
    # (measured ~85% of HBM roofline; VMEM cost stays trivial).
    tm = min(_round_up(-(-batch // 2), 128), 512)
    return tm, _round_up(batch, tm)


def prepare_params(params, embed_dim, *, compute_dtype=jnp.bfloat16):
    """One-time parameter preparation (call ONCE, not per forward):
    zero-pad every feature dim to a multiple of 128 (lane-dense), cast weights
    to the MXU input dtype, and pack (bias, ln_gamma, ln_beta) into a single
    (8, dpo) f32 slab per layer."""
    num_layers = len(params)
    dims = [int(embed_dim)] + [int(p["w"].shape[1]) for p in params]
    dims_pad = [_round_up(max(d, 1), 128) for d in dims]
    padded = []
    for li, p in enumerate(params):
        di, do = dims[li], dims[li + 1]
        dpi, dpo = dims_pad[li], dims_pad[li + 1]
        w = jnp.pad(p["w"].astype(compute_dtype), ((0, dpi - di), (0, dpo - do)))
        aux = jnp.zeros((8, dpo), jnp.float32)
        aux = aux.at[0, :do].set(p["b"].astype(jnp.float32))
        if li < num_layers - 1:
            aux = aux.at[1, :do].set(p["ln_g"].astype(jnp.float32))
            aux = aux.at[2, :do].set(p["ln_b"].astype(jnp.float32))
        padded.append({"w": w, "aux": aux})
    meta = dict(
        num_layers=num_layers,
        dims=tuple(dims),
        dims_pad=tuple(dims_pad),
        compute_dtype=compute_dtype,
        # f32 "parity" mode must force HIGHEST: default precision lowers f32
        # matmuls to bf16 MXU passes anyway.
        matmul_precision=(jax.lax.Precision.HIGHEST
                          if jnp.dtype(compute_dtype) == jnp.dtype(jnp.float32)
                          else None),
    )
    return padded, meta


def mlp_classif_head_forward(x, padded_params, meta):
    """x: [B, embed_dim] -> logits [B, 1] float32, in ONE fused pallas_call."""
    B, embed_dim = x.shape
    dims, dims_pad = meta["dims"], meta["dims_pad"]
    num_layers = meta["num_layers"]
    compute_dtype = meta["compute_dtype"]
    assert embed_dim == dims[0], (embed_dim, dims[0])

    tm, m_pad = _choose_tiling(B)

    # Single fused pad (+ cast) of the activations.
    xp = jnp.pad(x.astype(compute_dtype),
                 ((0, m_pad - B), (0, dims_pad[0] - embed_dim)))

    inputs = [xp]
    in_specs = [pl.BlockSpec((tm, dims_pad[0]), lambda i: (i, 0))]
    for li, p in enumerate(padded_params):
        dpi, dpo = dims_pad[li], dims_pad[li + 1]
        inputs += [p["w"], p["aux"]]
        # Grid-invariant (resident) operands: index_map -> (0, 0); DMA'd once.
        # (Single-buffering them via pipeline_mode only matters at much larger
        # embed/hid dims; total VMEM here is < 1 MiB, so defaults are fine.)
        in_specs += [pl.BlockSpec((dpi, dpo), lambda i: (0, 0)),
                     pl.BlockSpec((8, dpo), lambda i: (0, 0))]

    kernel = functools.partial(
        _mlp_head_kernel,
        num_layers=num_layers,
        true_dims=dims,
        compute_dtype=compute_dtype,
        matmul_precision=meta["matmul_precision"],
    )

    y_lane = pl.pallas_call(
        kernel,
        out_shape=jax.ShapeDtypeStruct((1, m_pad), jnp.float32),
        grid=(m_pad // tm,),
        in_specs=in_specs,
        out_specs=pl.BlockSpec((1, tm), lambda i: (0, i)),
        compiler_params=pltpu.CompilerParams(
            dimension_semantics=("parallel",)),
    )(*inputs)

    return y_lane[0, :B][:, None]          # true [B, 1] logits


# --------------------------- pure-JAX reference ---------------------------

def mlp_classif_head_reference(x, params, compute_dtype=jnp.float32):
    h = x.astype(jnp.float32)
    n = len(params)
    for i, p in enumerate(params):
        h = jnp.dot(h.astype(compute_dtype), p["w"].astype(compute_dtype),
                    preferred_element_type=jnp.float32) + p["b"].astype(jnp.float32)
        if i < n - 1:
            mu = jnp.mean(h, axis=-1, keepdims=True)
            var = jnp.mean(jnp.square(h - mu), axis=-1, keepdims=True)
            h = (h - mu) * jax.lax.rsqrt(var + jnp.float32(1e-5))
            h = h * p["ln_g"] + p["ln_b"]
            h = _gelu_erf(h)
    return h


# ------------------------------- init / main -------------------------------

def init_params(key, cfg):
    D = cfg["embed_dim"]
    H = cfg["classif_head_hid_dim"]
    L = cfg["classif_head_num_layers"]
    keys = jax.random.split(key, 2 * L)
    params = []
    for i in range(L):
        in_dim = D if i == 0 else H
        out_dim = 1 if i == L - 1 else H
        w = jax.random.normal(keys[2 * i], (in_dim, out_dim), jnp.float32)
        w = w / jnp.sqrt(jnp.float32(in_dim))
        b = 0.01 * jax.random.normal(keys[2 * i + 1], (out_dim,), jnp.float32)
        p = {"w": w, "b": b}
        if i < L - 1:
            p["ln_g"] = jnp.ones((out_dim,), jnp.float32)
            p["ln_b"] = jnp.zeros((out_dim,), jnp.float32)
        params.append(p)
    return params


if __name__ == "__main__":
    cfg = dict(
        embed_dim=32,                 # cfg.cromotex.embed_dim
        classif_head_hid_dim=128,     # cfg.cromotex.classif_head_hid_dim
        classif_head_num_layers=3,    # cfg.cromotex.classif_head_num_layers
        classif_head_dropout=0.1,     # eval forward: identity
    )

    key = jax.random.PRNGKey(0)
    k_x1, k_x2, k_p = jax.random.split(key, 3)
    params = init_params(k_p, cfg)

    # One-time parameter prep (padding + bf16 cast), hoisted out of the call path.
    padded_params, meta = prepare_params(params, cfg["embed_dim"],
                                         compute_dtype=jnp.bfloat16)
    fwd = jax.jit(lambda xx, pp: mlp_classif_head_forward(xx, pp, meta))

    # Case 1: small batch -> single grid step.
    B1 = 16
    x1 = jax.random.normal(k_x1, (B1, cfg["embed_dim"]), jnp.float32)
    y1 = fwd(x1, padded_params)
    jax.block_until_ready(y1)
    assert y1.shape == (B1, 1), y1.shape
    assert bool(jnp.all(jnp.isfinite(y1)))
    # Tight check against a reference with matching bf16-matmul / f32-accum math.
    ref1_bf16 = mlp_classif_head_reference(x1, params, jnp.bfloat16)
    assert jnp.allclose(y1, ref1_bf16, atol=2e-3, rtol=2e-3), \
        float(jnp.max(jnp.abs(y1 - ref1_bf16)))
    # Sanity check against the full-f32 reference (bf16 MXU inputs => looser tol).
    ref1_f32 = mlp_classif_head_reference(x1, params, jnp.float32)
    assert jnp.allclose(y1, ref1_f32, atol=5e-2, rtol=5e-2), \
        float(jnp.max(jnp.abs(y1 - ref1_f32)))

    # Case 2: larger batch -> >=2 "parallel" row-grid steps (v7x megacore path)
    # plus padded batch rows that are sliced away.
    B2 = 300
    x2 = jax.random.normal(k_x2, (B2, cfg["embed_dim"]), jnp.float32)
    y2 = fwd(x2, padded_params)
    jax.block_until_ready(y2)
    assert y2.shape == (B2, 1), y2.shape
    assert bool(jnp.all(jnp.isfinite(y2)))
    ref2_bf16 = mlp_classif_head_reference(x2, params, jnp.bfloat16)
    assert jnp.allclose(y2, ref2_bf16, atol=2e-3, rtol=2e-3), \
        float(jnp.max(jnp.abs(y2 - ref2_bf16)))

    print("KERNEL_OK")
</pallas_src>

<mosaic_0001>
module attributes {stable_mosaic.version = 11 : i64} {
  func.func @_mlp_head_kernel(%arg0: i32, %arg1: memref<16x128xbf16, #tpu.memory_space<vmem>>, %arg2: memref<128x128xbf16, #tpu.memory_space<vmem>>, %arg3: memref<8x128xf32, #tpu.memory_space<vmem>>, %arg4: memref<128x128xbf16, #tpu.memory_space<vmem>>, %arg5: memref<8x128xf32, #tpu.memory_space<vmem>>, %arg6: memref<128x128xbf16, #tpu.memory_space<vmem>>, %arg7: memref<8x128xf32, #tpu.memory_space<vmem>>, %arg8: memref<1x16xf32, #tpu.memory_space<vmem>>) attributes {dimension_semantics = [#tpu.dimension_semantics<parallel>], iteration_bounds = array<i64: 1>, scalar_prefetch = 0 : i64, scratch_operands = 0 : i64, tpu.core_type = #tpu.core_type<tc>, window_params = [{transform_indices = @transform_0, window_bounds = array<i64: 16, 128>}, {pipeline_mode = #tpu.pipeline_mode<synchronous>, transform_indices = @transform_1, window_bounds = array<i64: 128, 128>}, {pipeline_mode = #tpu.pipeline_mode<synchronous>, transform_indices = @transform_2, window_bounds = array<i64: 8, 128>}, {pipeline_mode = #tpu.pipeline_mode<synchronous>, transform_indices = @transform_3, window_bounds = array<i64: 128, 128>}, {pipeline_mode = #tpu.pipeline_mode<synchronous>, transform_indices = @transform_4, window_bounds = array<i64: 8, 128>}, {pipeline_mode = #tpu.pipeline_mode<synchronous>, transform_indices = @transform_5, window_bounds = array<i64: 128, 128>}, {pipeline_mode = #tpu.pipeline_mode<synchronous>, transform_indices = @transform_6, window_bounds = array<i64: 8, 128>}, {transform_indices = @transform_7, window_bounds = array<i64: 1, 16>}]} {
    %c0 = arith.constant 0 : index
    %c0_0 = arith.constant 0 : index
    %0 = vector.load %arg1[%c0, %c0_0] : memref<16x128xbf16, #tpu.memory_space<vmem>>, vector<16x128xbf16>
    %c0_1 = arith.constant 0 : index
    %c0_2 = arith.constant 0 : index
    %1 = vector.load %arg2[%c0_1, %c0_2] : memref<128x128xbf16, #tpu.memory_space<vmem>>, vector<128x128xbf16>
    %cst = arith.constant dense<0.000000e+00> : vector<16x128xf32>
    %2 = tpu.matmul %0, %1, %cst {dimension_numbers = #tpu.dot_dimension_numbers<[1], [0], [0], [1], [0, 0, 1, 1], [], []>} : vector<16x128xbf16>, vector<128x128xbf16>, vector<16x128xf32> -> vector<16x128xf32>
    %c0_3 = arith.constant 0 : index
    %c0_4 = arith.constant 0 : index
    %3 = vector.load %arg3[%c0_3, %c0_4] : memref<8x128xf32, #tpu.memory_space<vmem>>, vector<1x128xf32>
    %4 = vector.broadcast %3 : vector<1x128xf32> to vector<16x128xf32>
    %5 = arith.addf %2, %4 : vector<16x128xf32>
    %c1 = arith.constant 1 : index
    %c0_5 = arith.constant 0 : index
    %6 = vector.load %arg3[%c1, %c0_5] : memref<8x128xf32, #tpu.memory_space<vmem>>, vector<1x128xf32>
    %c2 = arith.constant 2 : index
    %c0_6 = arith.constant 0 : index
    %7 = vector.load %arg3[%c2, %c0_6] : memref<8x128xf32, #tpu.memory_space<vmem>>, vector<1x128xf32>
    %cst_7 = arith.constant dense<0.000000e+00> : vector<16xf32>
    %8 = vector.multi_reduction <add>, %5, %cst_7 [1] : vector<16x128xf32> to vector<16xf32>
    %9 = vector.shape_cast %8 : vector<16xf32> to vector<16x1xf32>
    %cst_8 = arith.constant 1.280000e+02 : f32
    %10 = vector.broadcast %cst_8 : f32 to vector<16x1xf32>
    %11 = arith.divf %9, %10 : vector<16x1xf32>
    %12 = vector.broadcast %11 : vector<16x1xf32> to vector<16x128xf32>
    %13 = arith.subf %5, %12 : vector<16x128xf32>
    %14 = arith.mulf %13, %13 : vector<16x128xf32>
    %cst_9 = arith.constant dense<0.000000e+00> : vector<16xf32>
    %15 = vector.multi_reduction <add>, %14, %cst_9 [1] : vector<16x128xf32> to vector<16xf32>
    %16 = vector.shape_cast %15 : vector<16xf32> to vector<16x1xf32>
    %cst_10 = arith.constant 1.280000e+02 : f32
    %17 = vector.broadcast %cst_10 : f32 to vector<16x1xf32>
    %18 = arith.divf %16, %17 : vector<16x1xf32>
    %19 = vector.broadcast %11 : vector<16x1xf32> to vector<16x128xf32>
    %20 = arith.subf %5, %19 : vector<16x128xf32>
    %cst_11 = arith.constant 9.99999974E-6 : f32
    %21 = vector.broadcast %cst_11 : f32 to vector<16x1xf32>
    %22 = arith.addf %18, %21 : vector<16x1xf32>
    %23 = math.rsqrt %22 : vector<16x1xf32>
    %24 = vector.broadcast %23 : vector<16x1xf32> to vector<16x128xf32>
    %25 = arith.mulf %20, %24 : vector<16x128xf32>
    %26 = vector.broadcast %6 : vector<1x128xf32> to vector<16x128xf32>
    %27 = arith.mulf %25, %26 : vector<16x128xf32>
    %28 = vector.broadcast %7 : vector<1x128xf32> to vector<16x128xf32>
    %29 = arith.addf %27, %28 : vector<16x128xf32>
    %cst_12 = arith.constant 5.000000e-01 : f32
    %30 = vector.broadcast %cst_12 : f32 to vector<16x128xf32>
    %31 = arith.mulf %30, %29 : vector<16x128xf32>
    %cst_13 = arith.constant 0.707106769 : f32
    %32 = vector.broadcast %cst_13 : f32 to vector<16x128xf32>
    %33 = arith.mulf %29, %32 : vector<16x128xf32>
    %cst_14 = arith.constant -4.000000e+00 : f32
    %cst_15 = arith.constant 4.000000e+00 : f32
    %34 = vector.broadcast %cst_14 : f32 to vector<16x128xf32>
    %35 = arith.maximumf %34, %33 : vector<16x128xf32>
    %36 = vector.broadcast %cst_15 : f32 to vector<16x128xf32>
    %37 = arith.minimumf %36, %35 : vector<16x128xf32>
    %38 = arith.mulf %37, %37 : vector<16x128xf32>
    %cst_16 = arith.constant 2.29050653E-4 : f32
    %39 = vector.broadcast %cst_16 : f32 to vector<16x128xf32>
    %40 = arith.mulf %39, %38 : vector<16x128xf32>
    %cst_17 = arith.constant 0.00340829091 : f32
    %41 = vector.broadcast %cst_17 : f32 to vector<16x128xf32>
    %42 = arith.addf %40, %41 : vector<16x128xf32>
    %43 = arith.mulf %42, %38 : vector<16x128xf32>
    %cst_18 = arith.constant 0.0509556942 : f32
    %44 = vector.broadcast %cst_18 : f32 to vector<16x128xf32>
    %45 = arith.addf %43, %44 : vector<16x128xf32>
    %46 = arith.mulf %45, %38 : vector<16x128xf32>
    %cst_19 = arith.constant 0.185208321 : f32
    %47 = vector.broadcast %cst_19 : f32 to vector<16x128xf32>
    %48 = arith.addf %46, %47 : vector<16x128xf32>
    %49 = arith.mulf %48, %38 : vector<16x128xf32>
    %cst_20 = arith.constant 1.12837911 : f32
    %50 = vector.broadcast %cst_20 : f32 to vector<16x128xf32>
    %51 = arith.addf %49, %50 : vector<16x128xf32>
    %52 = arith.mulf %37, %51 : vector<16x128xf32>
    %cst_21 = arith.constant -1.17916031E-7 : f32
    %53 = vector.broadcast %cst_21 : f32 to vector<16x128xf32>
    %54 = arith.mulf %53, %38 : vector<16x128xf32>
    %cst_22 = arith.constant 2.35479656E-5 : f32
    %55 = vector.broadcast %cst_22 : f32 to vector<16x128xf32>
    %56 = arith.addf %54, %55 : vector<16x128xf32>
    %57 = arith.mulf %56, %38 : vector<16x128xf32>
    %cst_23 = arith.constant 0.00101796258 : f32
    %58 = vector.broadcast %cst_23 : f32 to vector<16x128xf32>
    %59 = arith.addf %57, %58 : vector<16x128xf32>
    %60 = arith.mulf %59, %38 : vector<16x128xf32>
    %cst_24 = arith.constant 0.0140704699 : f32
    %61 = vector.broadcast %cst_24 : f32 to vector<16x128xf32>
    %62 = arith.addf %60, %61 : vector<16x128xf32>
    %63 = arith.mulf %62, %38 : vector<16x128xf32>
    %cst_25 = arith.constant 0.110985048 : f32
    %64 = vector.broadcast %cst_25 : f32 to vector<16x128xf32>
    %65 = arith.addf %63, %64 : vector<16x128xf32>
    %66 = arith.mulf %65, %38 : vector<16x128xf32>
    %cst_26 = arith.constant 0.497469246 : f32
    %67 = vector.broadcast %cst_26 : f32 to vector<16x128xf32>
    %68 = arith.addf %66, %67 : vector<16x128xf32>
    %69 = arith.mulf %68, %38 : vector<16x128xf32>
    %cst_27 = arith.constant 1.000000e+00 : f32
    %70 = vector.broadcast %cst_27 : f32 to vector<16x128xf32>
    %71 = arith.addf %69, %70 : vector<16x128xf32>
    %72 = tpu.reciprocal %71 : vector<16x128xf32> -> vector<16x128xf32>
    %73 = arith.mulf %52, %72 : vector<16x128xf32>
    %cst_28 = arith.constant 1.000000e+00 : f32
    %74 = vector.broadcast %cst_28 : f32 to vector<16x128xf32>
    %75 = arith.addf %74, %73 : vector<16x128xf32>
    %76 = arith.mulf %31, %75 : vector<16x128xf32>
    %77 = arith.truncf %76 : vector<16x128xf32> to vector<16x128xbf16>
    %c0_29 = arith.constant 0 : index
    %c0_30 = arith.constant 0 : index
    %78 = vector.load %arg4[%c0_29, %c0_30] : memref<128x128xbf16, #tpu.memory_space<vmem>>, vector<128x128xbf16>
    %cst_31 = arith.constant dense<0.000000e+00> : vector<16x128xf32>
    %79 = tpu.matmul %77, %78, %cst_31 {dimension_numbers = #tpu.dot_dimension_numbers<[1], [0], [0], [1], [0, 0, 1, 1], [], []>} : vector<16x128xbf16>, vector<128x128xbf16>, vector<16x128xf32> -> vector<16x128xf32>
    %c0_32 = arith.constant 0 : index
    %c0_33 = arith.constant 0 : index
    %80 = vector.load %arg5[%c0_32, %c0_33] : memref<8x128xf32, #tpu.memory_space<vmem>>, vector<1x128xf32>
    %81 = vector.broadcast %80 : vector<1x128xf32> to vector<16x128xf32>
    %82 = arith.addf %79, %81 : vector<16x128xf32>
    %c1_34 = arith.constant 1 : index
    %c0_35 = arith.constant 0 : index
    %83 = vector.load %arg5[%c1_34, %c0_35] : memref<8x128xf32, #tpu.memory_space<vmem>>, vector<1x128xf32>
    %c2_36 = arith.constant 2 : index
    %c0_37 = arith.constant 0 : index
    %84 = vector.load %arg5[%c2_36, %c0_37] : memref<8x128xf32, #tpu.memory_space<vmem>>, vector<1x128xf32>
    %cst_38 = arith.constant dense<0.000000e+00> : vector<16xf32>
    %85 = vector.multi_reduction <add>, %82, %cst_38 [1] : vector<16x128xf32> to vector<16xf32>
    %86 = vector.shape_cast %85 : vector<16xf32> to vector<16x1xf32>
    %cst_39 = arith.constant 1.280000e+02 : f32
    %87 = vector.broadcast %cst_39 : f32 to vector<16x1xf32>
    %88 = arith.divf %86, %87 : vector<16x1xf32>
    %89 = vector.broadcast %88 : vector<16x1xf32> to vector<16x128xf32>
    %90 = arith.subf %82, %89 : vector<16x128xf32>
    %91 = arith.mulf %90, %90 : vector<16x128xf32>
    %cst_40 = arith.constant dense<0.000000e+00> : vector<16xf32>
    %92 = vector.multi_reduction <add>, %91, %cst_40 [1] : vector<16x128xf32> to vector<16xf32>
    %93 = vector.shape_cast %92 : vector<16xf32> to vector<16x1xf32>
    %cst_41 = arith.constant 1.280000e+02 : f32
    %94 = vector.broadcast %cst_41 : f32 to vector<16x1xf32>
    %95 = arith.divf %93, %94 : vector<16x1xf32>
    %96 = vector.broadcast %88 : vector<16x1xf32> to vector<16x128xf32>
    %97 = arith.subf %82, %96 : vector<16x128xf32>
    %cst_42 = arith.constant 9.99999974E-6 : f32
    %98 = vector.broadcast %cst_42 : f32 to vector<16x1xf32>
    %99 = arith.addf %95, %98 : vector<16x1xf32>
    %100 = math.rsqrt %99 : vector<16x1xf32>
    %101 = vector.broadcast %100 : vector<16x1xf32> to vector<16x128xf32>
    %102 = arith.mulf %97, %101 : vector<16x128xf32>
    %103 = vector.broadcast %83 : vector<1x128xf32> to vector<16x128xf32>
    %104 = arith.mulf %102, %103 : vector<16x128xf32>
    %105 = vector.broadcast %84 : vector<1x128xf32> to vector<16x128xf32>
    %106 = arith.addf %104, %105 : vector<16x128xf32>
    %cst_43 = arith.constant 5.000000e-01 : f32
    %107 = vector.broadcast %cst_43 : f32 to vector<16x128xf32>
    %108 = arith.mulf %107, %106 : vector<16x128xf32>
    %cst_44 = arith.constant 0.707106769 : f32
    %109 = vector.broadcast %cst_44 : f32 to vector<16x128xf32>
    %110 = arith.mulf %106, %109 : vector<16x128xf32>
    %cst_45 = arith.constant -4.000000e+00 : f32
    %cst_46 = arith.constant 4.000000e+00 : f32
    %111 = vector.broadcast %cst_45 : f32 to vector<16x128xf32>
    %112 = arith.maximumf %111, %110 : vector<16x128xf32>
    %113 = vector.broadcast %cst_46 : f32 to vector<16x128xf32>
    %114 = arith.minimumf %113, %112 : vector<16x128xf32>
    %115 = arith.mulf %114, %114 : vector<16x128xf32>
    %cst_47 = arith.constant 2.29050653E-4 : f32
    %116 = vector.broadcast %cst_47 : f32 to vector<16x128xf32>
    %117 = arith.mulf %116, %115 : vector<16x128xf32>
    %cst_48 = arith.constant 0.00340829091 : f32
    %118 = vector.broadcast %cst_48 : f32 to vector<16x128xf32>
    %119 = arith.addf %117, %118 : vector<16x128xf32>
    %120 = arith.mulf %119, %115 : vector<16x128xf32>
    %cst_49 = arith.constant 0.0509556942 : f32
    %121 = vector.broadcast %cst_49 : f32 to vector<16x128xf32>
    %122 = arith.addf %120, %121 : vector<16x128xf32>
    %123 = arith.mulf %122, %115 : vector<16x128xf32>
    %cst_50 = arith.constant 0.185208321 : f32
    %124 = vector.broadcast %cst_50 : f32 to vector<16x128xf32>
    %125 = arith.addf %123, %124 : vector<16x128xf32>
    %126 = arith.mulf %125, %115 : vector<16x128xf32>
    %cst_51 = arith.constant 1.12837911 : f32
    %127 = vector.broadcast %cst_51 : f32 to vector<16x128xf32>
    %128 = arith.addf %126, %127 : vector<16x128xf32>
    %129 = arith.mulf %114, %128 : vector<16x128xf32>
    %cst_52 = arith.constant -1.17916031E-7 : f32
    %130 = vector.broadcast %cst_52 : f32 to vector<16x128xf32>
    %131 = arith.mulf %130, %115 : vector<16x128xf32>
    %cst_53 = arith.constant 2.35479656E-5 : f32
    %132 = vector.broadcast %cst_53 : f32 to vector<16x128xf32>
    %133 = arith.addf %131, %132 : vector<16x128xf32>
    %134 = arith.mulf %133, %115 : vector<16x128xf32>
    %cst_54 = arith.constant 0.00101796258 : f32
    %135 = vector.broadcast %cst_54 : f32 to vector<16x128xf32>
    %136 = arith.addf %134, %135 : vector<16x128xf32>
    %137 = arith.mulf %136, %115 : vector<16x128xf32>
    %cst_55 = arith.constant 0.0140704699 : f32
    %138 = vector.broadcast %cst_55 : f32 to vector<16x128xf32>
    %139 = arith.addf %137, %138 : vector<16x128xf32>
    %140 = arith.mulf %139, %115 : vector<16x128xf32>
    %cst_56 = arith.constant 0.110985048 : f32
    %141 = vector.broadcast %cst_56 : f32 to vector<16x128xf32>
    %142 = arith.addf %140, %141 : vector<16x128xf32>
    %143 = arith.mulf %142, %115 : vector<16x128xf32>
    %cst_57 = arith.constant 0.497469246 : f32
    %144 = vector.broadcast %cst_57 : f32 to vector<16x128xf32>
    %145 = arith.addf %143, %144 : vector<16x128xf32>
    %146 = arith.mulf %145, %115 : vector<16x128xf32>
    %cst_58 = arith.constant 1.000000e+00 : f32
    %147 = vector.broadcast %cst_58 : f32 to vector<16x128xf32>
    %148 = arith.addf %146, %147 : vector<16x128xf32>
    %149 = tpu.reciprocal %148 : vector<16x128xf32> -> vector<16x128xf32>
    %150 = arith.mulf %129, %149 : vector<16x128xf32>
    %cst_59 = arith.constant 1.000000e+00 : f32
    %151 = vector.broadcast %cst_59 : f32 to vector<16x128xf32>
    %152 = arith.addf %151, %150 : vector<16x128xf32>
    %153 = arith.mulf %108, %152 : vector<16x128xf32>
    %154 = arith.truncf %153 : vector<16x128xf32> to vector<16x128xbf16>
    %c0_60 = arith.constant 0 : index
    %c0_61 = arith.constant 0 : index
    %155 = vector.load %arg6[%c0_60, %c0_61] : memref<128x128xbf16, #tpu.memory_space<vmem>>, vector<128x128xbf16>
    %cst_62 = arith.constant dense<0.000000e+00> : vector<16x128xf32>
    %156 = tpu.matmul %154, %155, %cst_62 {dimension_numbers = #tpu.dot_dimension_numbers<[1], [0], [0], [1], [0, 0, 1, 1], [], []>} : vector<16x128xbf16>, vector<128x128xbf16>, vector<16x128xf32> -> vector<16x128xf32>
    %c0_63 = arith.constant 0 : index
    %c0_64 = arith.constant 0 : index
    %157 = vector.load %arg7[%c0_63, %c0_64] : memref<8x128xf32, #tpu.memory_space<vmem>>, vector<1x128xf32>
    %158 = vector.broadcast %157 : vector<1x128xf32> to vector<16x128xf32>
    %159 = arith.addf %156, %158 : vector<16x128xf32>
    %160 = tpu.transpose %159, [1, 0] : vector<16x128xf32> -> vector<128x16xf32>
    %161 = vector.extract_strided_slice %160 {offsets = [0, 0], sizes = [1, 16], strides = [1, 1]} : vector<128x16xf32> to vector<1x16xf32>
    %c0_65 = arith.constant 0 : index
    %c0_66 = arith.constant 0 : index
    %162 = vector.load %arg8[%c0_65, %c0_66] : memref<1x16xf32, #tpu.memory_space<vmem>>, vector<1x16xf32>
    tpu.vector_store %arg8[%c0_65, %c0_66], %161 {strides = array<i32>} : memref<1x16xf32, #tpu.memory_space<vmem>>, vector<1x16xf32>,
    return
  }
  func.func @transform_0(%arg0: i32) -> (i32, i32) {
    %c0_i32 = arith.constant 0 : i32
    %c0_i32_0 = arith.constant 0 : i32
    return %arg0, %c0_i32 : i32, i32
  }
  func.func @transform_1(%arg0: i32) -> (i32, i32) {
    %c0_i32 = arith.constant 0 : i32
    %c0_i32_0 = arith.constant 0 : i32
    %c0_i32_1 = arith.constant 0 : i32
    return %c0_i32, %c0_i32_0 : i32, i32
  }
  func.func @transform_2(%arg0: i32) -> (i32, i32) {
    %c0_i32 = arith.constant 0 : i32
    %c0_i32_0 = arith.constant 0 : i32
    %c0_i32_1 = arith.constant 0 : i32
    return %c0_i32, %c0_i32_0 : i32, i32
  }
  func.func @transform_3(%arg0: i32) -> (i32, i32) {
    %c0_i32 = arith.constant 0 : i32
    %c0_i32_0 = arith.constant 0 : i32
    %c0_i32_1 = arith.constant 0 : i32
    return %c0_i32, %c0_i32_0 : i32, i32
  }
  func.func @transform_4(%arg0: i32) -> (i32, i32) {
    %c0_i32 = arith.constant 0 : i32
    %c0_i32_0 = arith.constant 0 : i32
    %c0_i32_1 = arith.constant 0 : i32
    return %c0_i32, %c0_i32_0 : i32, i32
  }
  func.func @transform_5(%arg0: i32) -> (i32, i32) {
    %c0_i32 = arith.constant 0 : i32
    %c0_i32_0 = arith.constant 0 : i32
    %c0_i32_1 = arith.constant 0 : i32
    return %c0_i32, %c0_i32_0 : i32, i32
  }
  func.func @transform_6(%arg0: i32) -> (i32, i32) {
    %c0_i32 = arith.constant 0 : i32
    %c0_i32_0 = arith.constant 0 : i32
    %c0_i32_1 = arith.constant 0 : i32
    return %c0_i32, %c0_i32_0 : i32, i32
  }
  func.func @transform_7(%arg0: i32) -> (i32, i32) {
    %c0_i32 = arith.constant 0 : i32
    %c0_i32_0 = arith.constant 0 : i32
    return %c0_i32, %arg0 : i32, i32
  }
}

</mosaic_0001>

<llo_original>
// kernel: _lambda_.1
$region0: #{_lambda_.1}
  #allocation0 [shape = 'u32[]', space=smem, size = 0x4, offset = 0x4, fixed_abs, tag = 'smem constant byte address 0x4 - core index']
  #allocation1 [shape = 'u32[144,128]{1,0:T(1,128)}', space=vmem, size = 0x12000, scoped, tag = 'internal scratch']
  %s0 = inlined_call_operand.vmem [shape: bf16[16,128], index: 0, kind: input, shape index: {}]
  %s1 = inlined_call_operand.hbm [shape: bf16[128,128], index: 1, kind: input, shape index: {}]
  %s2 = inlined_call_operand.vmem [shape: f32[8,128], index: 2, kind: input, shape index: {}]
  %s3 = inlined_call_operand.hbm [shape: bf16[128,128], index: 3, kind: input, shape index: {}]
  %s4 = inlined_call_operand.vmem [shape: f32[8,128], index: 4, kind: input, shape index: {}]
  %s5 = inlined_call_operand.hbm [shape: bf16[128,128], index: 5, kind: input, shape index: {}]
  %s6 = inlined_call_operand.vmem [shape: f32[8,128], index: 6, kind: input, shape index: {}]
  %s7 = inlined_call_operand.hbm [shape: f32[1,16], index: 7, kind: output, shape index: {}]
  %s8 = sld [smem:[#allocation0]]
  $region50: #{_lambda_.1} parent=0
    _
  %s10 = ssub.s32 1, %s8
  %s11 = scalar_select 0, %s10, %s8
  $region1: #{_lambda_.1} parent=0
    #allocation2 [shape = 'u8[32768]{0}', space=vmem, size = 0x8000, scoped, tag = 'input window, operand 1, single buffered']
    #allocation3 [shape = 's32[1]{0}', space=sflag, size = 0x4, scoped, tag = 'scoped memory for _lambda_.1']
    #allocation4 [shape = 's32[1]{0}', space=sflag, size = 0x4, scoped, tag = 'scoped memory for _lambda_.1']
    #allocation5 [shape = 'u8[32768]{0}', space=vmem, size = 0x8000, scoped, tag = 'input window, operand 3, single buffered']
    #allocation6 [shape = 's32[1]{0}', space=sflag, size = 0x4, scoped, tag = 'scoped memory for _lambda_.1']
    #allocation7 [shape = 'u8[32768]{0}', space=vmem, size = 0x8000, scoped, tag = 'input window, operand 5, single buffered']
    #allocation8 [shape = 'u8[512]{0}', space=vmem, size = 0x400, scoped, tag = 'output window, operand 0, single buffered']
    %12 = vsyncpa [#allocation3], 0
    %13 = vsyncpa [#allocation6], 0
    %14 = vsyncpa [#allocation4], 0
    // Predicated region
    $region2: #{_lambda_.1} parent=1 // pred_check
      _
    $region3: #{_lambda_.1} parent=1 // pred_check_branch
      %16 = sbr.rel (0) target = $region5
    $region4: #{_lambda_.1} parent=1 // pred_region
      _
    $region5: #{_lambda_.1} parent=1 // pred_fallthru
      _
    // Predicated region
    $region6: #{_lambda_.1} parent=1 // pred_check
      _
    $region7: #{_lambda_.1} parent=1 // pred_check_branch
      %18 = sbr.rel (0) target = $region9
    $region8: #{_lambda_.1} parent=1 // pred_region
      %s20 = ssub.s32 1024, 1024
      %21 = vsyncadd [#allocation3], %s20
      %s22 = sshll.u32 [#allocation2], 4
      %s23 = int_to_ptr.vmem [resolvable:$true] %s22
      %28 = dma.hbm_to_vmem [thread:$0]  %s1, 1024, %s23, [#allocation3], 64, 64, 4
    $region9: #{_lambda_.1} parent=1 // pred_fallthru
      _
    // Predicated region
    $region10: #{_lambda_.1} parent=1 // pred_check
      _
    $region11: #{_lambda_.1} parent=1 // pred_check_branch
      %30 = sbr.rel (0) target = $region13
    $region12: #{_lambda_.1} parent=1 // pred_region
      _
    $region13: #{_lambda_.1} parent=1 // pred_fallthru
      _
    // Predicated region
    $region14: #{_lambda_.1} parent=1 // pred_check
      _
    $region15: #{_lambda_.1} parent=1 // pred_check_branch
      %32 = sbr.rel (0) target = $region17
    $region16: #{_lambda_.1} parent=1 // pred_region
      %s34 = ssub.s32 1024, 1024
      %35 = vsyncadd [#allocation6], %s34
      %s36 = sshll.u32 [#allocation5], 4
      %s37 = int_to_ptr.vmem [resolvable:$true] %s36
      %42 = dma.hbm_to_vmem [thread:$0]  %s3, 1024, %s37, [#allocation6], 64, 64, 4
    $region17: #{_lambda_.1} parent=1 // pred_fallthru
      _
    // Predicated region
    $region18: #{_lambda_.1} parent=1 // pred_check
      _
    $region19: #{_lambda_.1} parent=1 // pred_check_branch
      %44 = sbr.rel (0) target = $region21
    $region20: #{_lambda_.1} parent=1 // pred_region
      _
    $region21: #{_lambda_.1} parent=1 // pred_fallthru
      _
    // Predicated region
    $region22: #{_lambda_.1} parent=1 // pred_check
      _
    $region23: #{_lambda_.1} parent=1 // pred_check_branch
      %46 = sbr.rel (0) target = $region25
    $region24: #{_lambda_.1} parent=1 // pred_region
      %s48 = ssub.s32 1024, 1024
      %49 = vsyncadd [#allocation6], %s48
      %s50 = sshll.u32 [#allocation7], 4
      %s51 = int_to_ptr.vmem [resolvable:$true] %s50
      %56 = dma.hbm_to_vmem [thread:$0]  %s5, 1024, %s51, [#allocation6], 64, 64, 4
    $region25: #{_lambda_.1} parent=1 // pred_fallthru
      _
    // Predicated region
    $region26: #{_lambda_.1} parent=1 // pred_check
      _
    $region27: #{_lambda_.1} parent=1 // pred_check_branch
      %58 = sbr.rel (0) target = $region29
    $region28: #{_lambda_.1} parent=1 // pred_region
      _
    $region29: #{_lambda_.1} parent=1 // pred_fallthru
      _
    // Predicated region
    $region30: #{_lambda_.1} parent=1 // pred_check
      _
    $region31: #{_lambda_.1} parent=1 // pred_check_branch
      %60 = sbr.rel (0) target = $region33
    $region32: #{_lambda_.1} parent=1 // pred_region
      %61 = dma.done [#allocation3], 1024
    $region33: #{_lambda_.1} parent=1 // pred_fallthru
      _
    // Predicated region
    $region34: #{_lambda_.1} parent=1 // pred_check
      _
    $region35: #{_lambda_.1} parent=1 // pred_check_branch
      %63 = sbr.rel (0) target = $region37
    $region36: #{_lambda_.1} parent=1 // pred_region
      %64 = dma.done [#allocation6], 1024
    $region37: #{_lambda_.1} parent=1 // pred_fallthru
      _
    // Predicated region
    $region38: #{_lambda_.1} parent=1 // pred_check
      _
    $region39: #{_lambda_.1} parent=1 // pred_check_branch
      %66 = sbr.rel (0) target = $region41
    $region40: #{_lambda_.1} parent=1 // pred_region
      %67 = dma.done [#allocation6], 1024
    $region41: #{_lambda_.1} parent=1 // pred_fallthru
      _
    %v69 = vld [vmem:[%s0] sm:$0xf]
    %v70 = vld [vmem:[%s0 + $0x4] sm:$0xf]
    %v71 = vld [vmem:[#allocation2] sm:$0xf]
    %v72 = vld [vmem:[#allocation2 + $0x4] sm:$0xf]
    %v73 = vld [vmem:[#allocation2 + $0x8] sm:$0xf]
    %v74 = vld [vmem:[#allocation2 + $0xc] sm:$0xf]
    %v75 = vld [vmem:[#allocation2 + $0x10] sm:$0xf]
    %v76 = vld [vmem:[#allocation2 + $0x14] sm:$0xf]
    %v77 = vld [vmem:[#allocation2 + $0x18] sm:$0xf]
    %v78 = vld [vmem:[#allocation2 + $0x1c] sm:$0xf]
    %v79 = vld [vmem:[#allocation2 + $0x20] sm:$0xf]
    %v80 = vld [vmem:[#allocation2 + $0x24] sm:$0xf]
    %v81 = vld [vmem:[#allocation2 + $0x28] sm:$0xf]
    %v82 = vld [vmem:[#allocation2 + $0x2c] sm:$0xf]
    %v83 = vld [vmem:[#allocation2 + $0x30] sm:$0xf]
    %v84 = vld [vmem:[#allocation2 + $0x34] sm:$0xf]
    %v85 = vld [vmem:[#allocation2 + $0x38] sm:$0xf]
    %v86 = vld [vmem:[#allocation2 + $0x3c] sm:$0xf]
    %v87 = vld [vmem:[%s2] sm:$0x1]
    %v88 = vlaneseq
    %v89 = vshrl.u32 %v88, 7
    %v90 = vsub.s32 0, %v89
    %v91 = vrot.slane %v87, %v90
    %v94 = vunpack.c.l.b16 %v69
    %v95 = vunpack.c.l.b16 %v70
    %v96 = vpack.c.b16 %v95, %v94
    %v114 = vunpack.c.l.b16 %v71
    %v115 = vunpack.c.l.b16 %v72
    %v116 = vunpack.c.l.b16 %v73
    %v117 = vunpack.c.l.b16 %v74
    %v118 = vunpack.c.l.b16 %v75
    %v119 = vunpack.c.l.b16 %v76
    %v120 = vunpack.c.l.b16 %v77
    %v121 = vunpack.c.l.b16 %v78
    %v122 = vunpack.c.l.b16 %v79
    %v123 = vunpack.c.l.b16 %v80
    %v124 = vunpack.c.l.b16 %v81
    %v125 = vunpack.c.l.b16 %v82
    %v126 = vunpack.c.l.b16 %v83
    %v127 = vunpack.c.l.b16 %v84
    %v128 = vunpack.c.l.b16 %v85
    %v129 = vunpack.c.l.b16 %v86
    %v130 = vpack.c.b16 %v115, %v114
    %v131 = vpack.c.b16 %v117, %v116
    %v132 = vpack.c.b16 %v119, %v118
    %v133 = vpack.c.b16 %v121, %v120
    %v134 = vpack.c.b16 %v123, %v122
    %v135 = vpack.c.b16 %v125, %v124
    %v136 = vpack.c.b16 %v127, %v126
    %v137 = vpack.c.b16 %v129, %v128
    %146 = vmatprep.subr.bf16.mxu0 0
    %147 = vmatpush1.bf16.msra.mxu0 %v130
    %148 = vmatprep.subr.bf16.mxu0 0
    %149 = vmatpush1.bf16.msra.mxu0 %v131
    %150 = vmatprep.subr.bf16.mxu0 0
    %151 = vmatpush1.bf16.msra.mxu0 %v132
    %152 = vmatprep.subr.bf16.mxu0 0
    %153 = vmatpush1.bf16.msra.mxu0 %v133
    %154 = vmatprep.subr.bf16.mxu0 0
    %155 = vmatpush1.bf16.msra.mxu0 %v134
    %156 = vmatprep.subr.bf16.mxu0 0
    %157 = vmatpush1.bf16.msra.mxu0 %v135
    %158 = vmatprep.subr.bf16.mxu0 0
    %159 = vmatpush1.bf16.msra.mxu0 %v136
    %160 = vmatprep.subr.bf16.mxu0 0
    %161 = vmatpush1.bf16.msra.mxu0 %v137
    %162 = vmatprep.subr.bf16.mxu0 0
    %163 = vmatpush1.bf16.msra.mxu0 0
    %164 = vmatprep.subr.bf16.mxu0 0
    %165 = vmatpush1.bf16.msra.mxu0 0
    %166 = vmatprep.subr.bf16.mxu0 0
    %167 = vmatpush1.bf16.msra.mxu0 0
    %168 = vmatprep.subr.bf16.mxu0 0
    %169 = vmatpush1.bf16.msra.mxu0 0
    %170 = vmatprep.subr.bf16.mxu0 0
    %171 = vmatpush1.bf16.msra.mxu0 0
    %172 = vmatprep.subr.bf16.mxu0 0
    %173 = vmatpush1.bf16.msra.mxu0 0
    %174 = vmatprep.subr.bf16.mxu0 0
    %175 = vmatpush1.bf16.msra.mxu0 0
    %176 = vmatprep.subr.bf16.mxu0 0
    %177 = vmatpush1.bf16.msra.mxu0 0
    %178 = vmatprep.mubr.bf16.mxu0 0
    %179 = vmatmul.mubr.bf16.gmra.mrb[0].mxu0 %v96
    %v180 = vpop.f32.mrb[0].mxu0
    %v181 = vadd.f32 %v91, %v180
    %v182 = vpop.f32.mrb[0].mxu0
    %v183 = vpop.f32.mrb[0].mxu0
    %v184 = vadd.f32 %v91, %v183
    %v185 = vpop.f32.mrb[0].mxu0
    %186 = vdwg.mxu0
    %v187 = vld [vmem:[%s2 + $0x1] sm:$0x1]
    %v188 = vld [vmem:[%s2 + $0x2] sm:$0x1]
    %189 = vadd.xlane.f32.xlu0 %v181
    %v190 = vpop.xlane.xlu0 %189
    %191 = vadd.xlane.f32.xlu0 %v184
    %v192 = vpop.xlane.xlu0 %191
    %v193 = vrcp.pop 128.0
    %v194 = vmul.f32 %v190, %v193
    %v195 = vmul.f32 %v192, %v193
    %v196 = vsub.f32 %v181, %v194
    %v197 = vsub.f32 %v184, %v195
    %v198 = vmul.f32 %v196, %v196
    %v199 = vmul.f32 %v197, %v197
    %200 = vadd.xlane.f32.xlu0 %v198
    %v201 = vpop.xlane.xlu0 %200
    %202 = vadd.xlane.f32.xlu0 %v199
    %v203 = vpop.xlane.xlu0 %202
    %v204 = vmul.f32 %v201, %v193
    %v205 = vmul.f32 %v203, %v193
    %v206 = vadd.f32 %v204, 1e-05
    %v207 = vadd.f32 %v205, 1e-05
    %v208 = vrsqrt.pop %v206
    %v209 = vrsqrt.pop %v207
    %v210 = vmul.f32 %v196, %v208
    %v211 = vmul.f32 %v197, %v209
    %v212 = vlaneseq
    %v213 = vshrl.u32 %v212, 7
    %v214 = vsub.s32 0, %v213
    %v215 = vrot.slane %v187, %v214
    %v216 = vmul.f32 %v210, %v215
    %v217 = vmul.f32 %v211, %v215
    %v218 = vlaneseq
    %v219 = vshrl.u32 %v218, 7
    %v220 = vsub.s32 0, %v219
    %v221 = vrot.slane %v188, %v220
    %v222 = vadd.f32 %v216, %v221
    %v223 = vadd.f32 %v217, %v221
    %v224 = vmul.f32 %v222, 0.5
    %v225 = vmul.f32 %v223, 0.5
    %v226 = vmul.f32 %v222, 0.70710677
    %v227 = vmul.f32 %v223, 0.70710677
    %v228 = vmax.f32 %v226, -4.0
    %v229 = vmax.f32 %v227, -4.0
    %v230 = vmin.f32 %v228, 4.0
    %v231 = vmin.f32 %v229, 4.0
    %v232 = vmul.f32 %v230, %v230
    %v233 = vmul.f32 %v231, %v231
    %v234 = vmul.f32 %v232, 0.00022905065
    %v235 = vmul.f32 %v233, 0.00022905065
    %v236 = vadd.f32 %v234, 0.003408291
    %v237 = vadd.f32 %v235, 0.003408291
    %v238 = vmul.f32 %v236, %v232
    %v239 = vmul.f32 %v237, %v233
    %v240 = vadd.f32 %v238, 0.050955694
    %v241 = vadd.f32 %v239, 0.050955694
    %v242 = vmul.f32 %v240, %v232
    %v243 = vmul.f32 %v241, %v233
    %v244 = vadd.f32 %v242, 0.18520832
    %v245 = vadd.f32 %v243, 0.18520832
    %v246 = vmul.f32 %v244, %v232
    %v247 = vmul.f32 %v245, %v233
    %v248 = vadd.f32 %v246, 1.1283791
    %v249 = vadd.f32 %v247, 1.1283791
    %v250 = vmul.f32 %v230, %v248
    %v251 = vmul.f32 %v231, %v249
    %v252 = vmul.f32 %v232, -1.1791603e-07
    %v253 = vmul.f32 %v233, -1.1791603e-07
    %v254 = vadd.f32 %v252, 2.3547966e-05
    %v255 = vadd.f32 %v253, 2.3547966e-05
    %v256 = vmul.f32 %v254, %v232
    %v257 = vmul.f32 %v255, %v233
    %v258 = vadd.f32 %v256, 0.0010179626
    %v259 = vadd.f32 %v257, 0.0010179626
    %v260 = vmul.f32 %v258, %v232
    %v261 = vmul.f32 %v259, %v233
    %v262 = vadd.f32 %v260, 0.01407047
    %v263 = vadd.f32 %v261, 0.01407047
    %v264 = vmul.f32 %v262, %v232
    %v265 = vmul.f32 %v263, %v233
    %v266 = vadd.f32 %v264, 0.11098505
    %v267 = vadd.f32 %v265, 0.11098505
    %v268 = vmul.f32 %v266, %v232
    %v269 = vmul.f32 %v267, %v233
    %v270 = vadd.f32 %v268, 0.49746925
    %v271 = vadd.f32 %v269, 0.49746925
    %v272 = vmul.f32 %v270, %v232
    %v273 = vmul.f32 %v271, %v233
    %v274 = vadd.f32 %v272, 1.0
    %v275 = vadd.f32 %v273, 1.0
    %v276 = vrcp.pop %v274
    %v277 = vrcp.pop %v275
    %v278 = vmul.f32 %v250, %v276
    %v279 = vmul.f32 %v251, %v277
    %v280 = vadd.f32 %v278, 1.0
    %v281 = vadd.f32 %v279, 1.0
    %v282 = vmul.f32 %v224, %v280
    %v283 = vmul.f32 %v225, %v281
    %v284 = vpack.c.bf16 %v283, %v282
    %v285 = vld [vmem:[#allocation5] sm:$0xf]
    %v286 = vld [vmem:[#allocation5 + $0x4] sm:$0xf]
    %v287 = vld [vmem:[#allocation5 + $0x8] sm:$0xf]
    %v288 = vld [vmem:[#allocation5 + $0xc] sm:$0xf]
    %v289 = vld [vmem:[#allocation5 + $0x10] sm:$0xf]
    %v290 = vld [vmem:[#allocation5 + $0x14] sm:$0xf]
    %v291 = vld [vmem:[#allocation5 + $0x18] sm:$0xf]
    %v292 = vld [vmem:[#allocation5 + $0x1c] sm:$0xf]
    %v293 = vld [vmem:[#allocation5 + $0x20] sm:$0xf]
    %v294 = vld [vmem:[#allocation5 + $0x24] sm:$0xf]
    %v295 = vld [vmem:[#allocation5 + $0x28] sm:$0xf]
    %v296 = vld [vmem:[#allocation5 + $0x2c] sm:$0xf]
    %v297 = vld [vmem:[#allocation5 + $0x30] sm:$0xf]
    %v298 = vld [vmem:[#allocation5 + $0x34] sm:$0xf]
    %v299 = vld [vmem:[#allocation5 + $0x38] sm:$0xf]
    %v300 = vld [vmem:[#allocation5 + $0x3c] sm:$0xf]
    %v301 = vld [vmem:[%s4] sm:$0x1]
    %v302 = vlaneseq
    %v303 = vshrl.u32 %v302, 7
    %v304 = vsub.s32 0, %v303
    %v305 = vrot.slane %v301, %v304
    %v322 = vunpack.c.l.b16 %v285
    %v323 = vunpack.c.l.b16 %v286
    %v324 = vunpack.c.l.b16 %v287
    %v325 = vunpack.c.l.b16 %v288
    %v326 = vunpack.c.l.b16 %v289
    %v327 = vunpack.c.l.b16 %v290
    %v328 = vunpack.c.l.b16 %v291
    %v329 = vunpack.c.l.b16 %v292
    %v330 = vunpack.c.l.b16 %v293
    %v331 = vunpack.c.l.b16 %v294
    %v332 = vunpack.c.l.b16 %v295
    %v333 = vunpack.c.l.b16 %v296
    %v334 = vunpack.c.l.b16 %v297
    %v335 = vunpack.c.l.b16 %v298
    %v336 = vunpack.c.l.b16 %v299
    %v337 = vunpack.c.l.b16 %v300
    %v338 = vpack.c.b16 %v323, %v322
    %v339 = vpack.c.b16 %v325, %v324
    %v340 = vpack.c.b16 %v327, %v326
    %v341 = vpack.c.b16 %v329, %v328
    %v342 = vpack.c.b16 %v331, %v330
    %v343 = vpack.c.b16 %v333, %v332
    %v344 = vpack.c.b16 %v335, %v334
    %v345 = vpack.c.b16 %v337, %v336
    %354 = vmatprep.subr.bf16.mxu0 0
    %355 = vmatpush1.bf16.msra.mxu0 %v338
    %356 = vmatprep.subr.bf16.mxu0 0
    %357 = vmatpush1.bf16.msra.mxu0 %v339
    %358 = vmatprep.subr.bf16.mxu0 0
    %359 = vmatpush1.bf16.msra.mxu0 %v340
    %360 = vmatprep.subr.bf16.mxu0 0
    %361 = vmatpush1.bf16.msra.mxu0 %v341
    %362 = vmatprep.subr.bf16.mxu0 0
    %363 = vmatpush1.bf16.msra.mxu0 %v342
    %364 = vmatprep.subr.bf16.mxu0 0
    %365 = vmatpush1.bf16.msra.mxu0 %v343
    %366 = vmatprep.subr.bf16.mxu0 0
    %367 = vmatpush1.bf16.msra.mxu0 %v344
    %368 = vmatprep.subr.bf16.mxu0 0
    %369 = vmatpush1.bf16.msra.mxu0 %v345
    %370 = vmatprep.subr.bf16.mxu0 0
    %371 = vmatpush1.bf16.msra.mxu0 0
    %372 = vmatprep.subr.bf16.mxu0 0
    %373 = vmatpush1.bf16.msra.mxu0 0
    %374 = vmatprep.subr.bf16.mxu0 0
    %375 = vmatpush1.bf16.msra.mxu0 0
    %376 = vmatprep.subr.bf16.mxu0 0
    %377 = vmatpush1.bf16.msra.mxu0 0
    %378 = vmatprep.subr.bf16.mxu0 0
    %379 = vmatpush1.bf16.msra.mxu0 0
    %380 = vmatprep.subr.bf16.mxu0 0
    %381 = vmatpush1.bf16.msra.mxu0 0
    %382 = vmatprep.subr.bf16.mxu0 0
    %383 = vmatpush1.bf16.msra.mxu0 0
    %384 = vmatprep.subr.bf16.mxu0 0
    %385 = vmatpush1.bf16.msra.mxu0 0
    %386 = vmatprep.mubr.bf16.mxu0 0
    %387 = vmatmul.mubr.bf16.gmra.mrb[0].mxu0 %v284
    %v388 = vpop.f32.mrb[0].mxu0
    %v389 = vadd.f32 %v305, %v388
    %v390 = vpop.f32.mrb[0].mxu0
    %v391 = vpop.f32.mrb[0].mxu0
    %v392 = vadd.f32 %v305, %v391
    %v393 = vpop.f32.mrb[0].mxu0
    %394 = vdwg.mxu0
    %v395 = vld [vmem:[%s4 + $0x1] sm:$0x1]
    %v396 = vld [vmem:[%s4 + $0x2] sm:$0x1]
    %397 = vadd.xlane.f32.xlu0 %v389
    %v398 = vpop.xlane.xlu0 %397
    %399 = vadd.xlane.f32.xlu0 %v392
    %v400 = vpop.xlane.xlu0 %399
    %v401 = vmul.f32 %v398, %v193
    %v402 = vmul.f32 %v400, %v193
    %v403 = vsub.f32 %v389, %v401
    %v404 = vsub.f32 %v392, %v402
    %v405 = vmul.f32 %v403, %v403
    %v406 = vmul.f32 %v404, %v404
    %407 = vadd.xlane.f32.xlu0 %v405
    %v408 = vpop.xlane.xlu0 %407
    %409 = vadd.xlane.f32.xlu0 %v406
    %v410 = vpop.xlane.xlu0 %409
    %v411 = vmul.f32 %v408, %v193
    %v412 = vmul.f32 %v410, %v193
    %v413 = vadd.f32 %v411, 1e-05
    %v414 = vadd.f32 %v412, 1e-05
    %v415 = vrsqrt.pop %v413
    %v416 = vrsqrt.pop %v414
    %v417 = vmul.f32 %v403, %v415
    %v418 = vmul.f32 %v404, %v416
    %v419 = vlaneseq
    %v420 = vshrl.u32 %v419, 7
    %v421 = vsub.s32 0, %v420
    %v422 = vrot.slane %v395, %v421
    %v423 = vmul.f32 %v417, %v422
    %v424 = vmul.f32 %v418, %v422
    %v425 = vlaneseq
    %v426 = vshrl.u32 %v425, 7
    %v427 = vsub.s32 0, %v426
    %v428 = vrot.slane %v396, %v427
    %v429 = vadd.f32 %v423, %v428
    %v430 = vadd.f32 %v424, %v428
    %v431 = vmul.f32 %v429, 0.5
    %v432 = vmul.f32 %v430, 0.5
    %v433 = vmul.f32 %v429, 0.70710677
    %v434 = vmul.f32 %v430, 0.70710677
    %v435 = vmax.f32 %v433, -4.0
    %v436 = vmax.f32 %v434, -4.0
    %v437 = vmin.f32 %v435, 4.0
    %v438 = vmin.f32 %v436, 4.0
    %v439 = vmul.f32 %v437, %v437
    %v440 = vmul.f32 %v438, %v438
    %v441 = vmul.f32 %v439, 0.00022905065
    %v442 = vmul.f32 %v440, 0.00022905065
    %v443 = vadd.f32 %v441, 0.003408291
    %v444 = vadd.f32 %v442, 0.003408291
    %v445 = vmul.f32 %v443, %v439
    %v446 = vmul.f32 %v444, %v440
    %v447 = vadd.f32 %v445, 0.050955694
    %v448 = vadd.f32 %v446, 0.050955694
    %v449 = vmul.f32 %v447, %v439
    %v450 = vmul.f32 %v448, %v440
    %v451 = vadd.f32 %v449, 0.18520832
    %v452 = vadd.f32 %v450, 0.18520832
    %v453 = vmul.f32 %v451, %v439
    %v454 = vmul.f32 %v452, %v440
    %v455 = vadd.f32 %v453, 1.1283791
    %v456 = vadd.f32 %v454, 1.1283791
    %v457 = vmul.f32 %v437, %v455
    %v458 = vmul.f32 %v438, %v456
    %v459 = vmul.f32 %v439, -1.1791603e-07
    %v460 = vmul.f32 %v440, -1.1791603e-07
    %v461 = vadd.f32 %v459, 2.3547966e-05
    %v462 = vadd.f32 %v460, 2.3547966e-05
    %v463 = vmul.f32 %v461, %v439
    %v464 = vmul.f32 %v462, %v440
    %v465 = vadd.f32 %v463, 0.0010179626
    %v466 = vadd.f32 %v464, 0.0010179626
    %v467 = vmul.f32 %v465, %v439
    %v468 = vmul.f32 %v466, %v440
    %v469 = vadd.f32 %v467, 0.01407047
    %v470 = vadd.f32 %v468, 0.01407047
    %v471 = vmul.f32 %v469, %v439
    %v472 = vmul.f32 %v470, %v440
    %v473 = vadd.f32 %v471, 0.11098505
    %v474 = vadd.f32 %v472, 0.11098505
    %v475 = vmul.f32 %v473, %v439
    %v476 = vmul.f32 %v474, %v440
    %v477 = vadd.f32 %v475, 0.49746925
    %v478 = vadd.f32 %v476, 0.49746925
    %v479 = vmul.f32 %v477, %v439
    %v480 = vmul.f32 %v478, %v440
    %v481 = vadd.f32 %v479, 1.0
    %v482 = vadd.f32 %v480, 1.0
    %v483 = vrcp.pop %v481
    %v484 = vrcp.pop %v482
    %v485 = vmul.f32 %v457, %v483
    %v486 = vmul.f32 %v458, %v484
    %v487 = vadd.f32 %v485, 1.0
    %v488 = vadd.f32 %v486, 1.0
    %v489 = vmul.f32 %v431, %v487
    %v490 = vmul.f32 %v432, %v488
    %v491 = vpack.c.bf16 %v490, %v489
    %v492 = vld [vmem:[#allocation7] sm:$0xf]
    %v493 = vld [vmem:[#allocation7 + $0x4] sm:$0xf]
    %v494 = vld [vmem:[#allocation7 + $0x8] sm:$0xf]
    %v495 = vld [vmem:[#allocation7 + $0xc] sm:$0xf]
    %v496 = vld [vmem:[#allocation7 + $0x10] sm:$0xf]
    %v497 = vld [vmem:[#allocation7 + $0x14] sm:$0xf]
    %v498 = vld [vmem:[#allocation7 + $0x18] sm:$0xf]
    %v499 = vld [vmem:[#allocation7 + $0x1c] sm:$0xf]
    %v500 = vld [vmem:[#allocation7 + $0x20] sm:$0xf]
    %v501 = vld [vmem:[#allocation7 + $0x24] sm:$0xf]
    %v502 = vld [vmem:[#allocation7 + $0x28] sm:$0xf]
    %v503 = vld [vmem:[#allocation7 + $0x2c] sm:$0xf]
    %v504 = vld [vmem:[#allocation7 + $0x30] sm:$0xf]
    %v505 = vld [vmem:[#allocation7 + $0x34] sm:$0xf]
    %v506 = vld [vmem:[#allocation7 + $0x38] sm:$0xf]
    %v507 = vld [vmem:[#allocation7 + $0x3c] sm:$0xf]
    %v508 = vld [vmem:[%s6] sm:$0x1]
    %v509 = vlaneseq
    %v510 = vshrl.u32 %v509, 7
    %v511 = vsub.s32 0, %v510
    %v512 = vrot.slane %v508, %v511
    %v529 = vunpack.c.l.b16 %v492
    %v530 = vunpack.c.l.b16 %v493
    %v531 = vunpack.c.l.b16 %v494
    %v532 = vunpack.c.l.b16 %v495
    %v533 = vunpack.c.l.b16 %v496
    %v534 = vunpack.c.l.b16 %v497
    %v535 = vunpack.c.l.b16 %v498
    %v536 = vunpack.c.l.b16 %v499
    %v537 = vunpack.c.l.b16 %v500
    %v538 = vunpack.c.l.b16 %v501
    %v539 = vunpack.c.l.b16 %v502
    %v540 = vunpack.c.l.b16 %v503
    %v541 = vunpack.c.l.b16 %v504
    %v542 = vunpack.c.l.b16 %v505
    %v543 = vunpack.c.l.b16 %v506
    %v544 = vunpack.c.l.b16 %v507
    %v545 = vpack.c.b16 %v530, %v529
    %v546 = vpack.c.b16 %v532, %v531
    %v547 = vpack.c.b16 %v534, %v533
    %v548 = vpack.c.b16 %v536, %v535
    %v549 = vpack.c.b16 %v538, %v537
    %v550 = vpack.c.b16 %v540, %v539
    %v551 = vpack.c.b16 %v542, %v541
    %v552 = vpack.c.b16 %v544, %v543
    %561 = vmatprep.subr.bf16.mxu0 0
    %562 = vmatpush1.bf16.msra.mxu0 %v545
    %563 = vmatprep.subr.bf16.mxu0 0
    %564 = vmatpush1.bf16.msra.mxu0 %v546
    %565 = vmatprep.subr.bf16.mxu0 0
    %566 = vmatpush1.bf16.msra.mxu0 %v547
    %567 = vmatprep.subr.bf16.mxu0 0
    %568 = vmatpush1.bf16.msra.mxu0 %v548
    %569 = vmatprep.subr.bf16.mxu0 0
    %570 = vmatpush1.bf16.msra.mxu0 %v549
    %571 = vmatprep.subr.bf16.mxu0 0
    %572 = vmatpush1.bf16.msra.mxu0 %v550
    %573 = vmatprep.subr.bf16.mxu0 0
    %574 = vmatpush1.bf16.msra.mxu0 %v551
    %575 = vmatprep.subr.bf16.mxu0 0
    %576 = vmatpush1.bf16.msra.mxu0 %v552
    %577 = vmatprep.subr.bf16.mxu0 0
    %578 = vmatpush1.bf16.msra.mxu0 0
    %579 = vmatprep.subr.bf16.mxu0 0
    %580 = vmatpush1.bf16.msra.mxu0 0
    %581 = vmatprep.subr.bf16.mxu0 0
    %582 = vmatpush1.bf16.msra.mxu0 0
    %583 = vmatprep.subr.bf16.mxu0 0
    %584 = vmatpush1.bf16.msra.mxu0 0
    %585 = vmatprep.subr.bf16.mxu0 0
    %586 = vmatpush1.bf16.msra.mxu0 0
    %587 = vmatprep.subr.bf16.mxu0 0
    %588 = vmatpush1.bf16.msra.mxu0 0
    %589 = vmatprep.subr.bf16.mxu0 0
    %590 = vmatpush1.bf16.msra.mxu0 0
    %591 = vmatprep.subr.bf16.mxu0 0
    %592 = vmatpush1.bf16.msra.mxu0 0
    %593 = vmatprep.mubr.bf16.mxu0 0
    %594 = vmatmul.mubr.bf16.gmra.mrb[0].mxu0 %v491
    %v595 = vpop.f32.mrb[0].mxu0
    %v596 = vadd.f32 %v512, %v595
    %v597 = vpop.f32.mrb[0].mxu0
    %v598 = vpop.f32.mrb[0].mxu0
    %v599 = vadd.f32 %v512, %v598
    %v600 = vpop.f32.mrb[0].mxu0
    %601 = vdwg.mxu0
    %602 = vxpose.xlu0.b32.start [1/16] %v596, 128
    %603 = vxpose.xlu0.b32.cont [2/16] %v599, 128
    %604 = vxpose.xlu0.b32.cont [3/16] 0.0, 128
    %605 = vxpose.xlu0.b32.cont [4/16] 0.0, 128
    %606 = vxpose.xlu0.b32.cont [5/16] 0.0, 128
    %607 = vxpose.xlu0.b32.cont [6/16] 0.0, 128
    %608 = vxpose.xlu0.b32.cont [7/16] 0.0, 128
    %609 = vxpose.xlu0.b32.cont [8/16] 0.0, 128
    %610 = vxpose.xlu0.b32.cont [9/16] 0.0, 128
    %611 = vxpose.xlu0.b32.cont [10/16] 0.0, 128
    %612 = vxpose.xlu0.b32.cont [11/16] 0.0, 128
    %613 = vxpose.xlu0.b32.cont [12/16] 0.0, 128
    %614 = vxpose.xlu0.b32.cont [13/16] 0.0, 128
    %615 = vxpose.xlu0.b32.cont [14/16] 0.0, 128
    %616 = vxpose.xlu0.b32.cont [15/16] 0.0, 128
    %617 = vxpose.xlu0.b32.end [16/16] 0.0, 128
    %v618 = vpop.trf.xlu0
    %v619 = vpop.trf.xlu0
    %v620 = vpop.trf.xlu0
    %v621 = vpop.trf.xlu0
    %v622 = vpop.trf.xlu0
    %v623 = vpop.trf.xlu0
    %v624 = vpop.trf.xlu0
    %v625 = vpop.trf.xlu0
    %v626 = vpop.trf.xlu0
    %v627 = vpop.trf.xlu0
    %v628 = vpop.trf.xlu0
    %v629 = vpop.trf.xlu0
    %v630 = vpop.trf.xlu0
    %v631 = vpop.trf.xlu0
    %v632 = vpop.trf.xlu0
    %v633 = vpop.trf.xlu0
    %vm634 = vcmask 122880
    %635 = vst.msk [vmem:[#allocation8] sm:$0x1] %vm634, %v618
    // Predicated region
    $region42: #{_lambda_.1} parent=1 // pred_check
      _
    $region43: #{_lambda_.1} parent=1 // pred_check_branch
      %637 = sbr.rel (0) target = $region45
    $region44: #{_lambda_.1} parent=1 // pred_region
      %s639 = ssub.s32 16, 16
      %640 = vsyncadd [#allocation4], %s639
      %s642 = sshll.u32 [#allocation8], 4
      %s643 = int_to_ptr.vmem [resolvable:$true] %s642
      %645 = dma.vmem_to_hbm [thread:$0]  %s643, 16, %s7, [#allocation4]
    $region45: #{_lambda_.1} parent=1 // pred_fallthru
      _
    // Predicated region
    $region46: #{_lambda_.1} parent=1 // pred_check
      _
    $region47: #{_lambda_.1} parent=1 // pred_check_branch
      %647 = sbr.rel (0) target = $region49
    $region48: #{_lambda_.1} parent=1 // pred_region
      %648 = dma.done [#allocation4], 16
    $region49: #{_lambda_.1} parent=1 // pred_fallthru
      _
    %649 = vsyncpa [#allocation3], 1
    %650 = vsyncpa [#allocation6], 1
    %651 = vsyncpa [#allocation4], 1

</llo_original>
